<compile_context>
chip_gen: v7x
topology: tpu7x:2x2x1
jax: 0.10.0
libtpu: 0.0.40
codegen_flags: <defaults>
</compile_context>

<pallas_src>
import jax
import jax.numpy as jnp
from jax.experimental import pallas as pl
from jax.experimental.pallas import tpu as pltpu


def _round_up(x, m):
    return (x + m - 1) // m * m


# ---------------------------------------------------------------------------
# Kernels
# ---------------------------------------------------------------------------

def _linear_kernel(x_ref, w_ref, b_ref, o_ref):
    """Collapsed-K path: one MXU dot per (i, j) tile, bias fused, no scratch.

    x_ref: [tm, Kp] bf16   w_ref: [Kp, tn] bf16   b_ref: [1, tn] f32
    o_ref: [tm, tn] f32
    """
    o_ref[...] = (
        jnp.dot(x_ref[...], w_ref[...], preferred_element_type=jnp.float32)
        + b_ref[...]
    ).astype(o_ref.dtype)


def _linear_ksplit_kernel(x_ref, w_ref, b_ref, o_ref):
    """K-reduction fallback: accumulate into the resident f32 output block."""
    k = pl.program_id(2)

    @pl.when(k == 0)
    def _init():
        # Initialise with the bias so it is added exactly once.
        o_ref[...] = jnp.broadcast_to(b_ref[...], o_ref.shape)

    o_ref[...] += jnp.dot(
        x_ref[...], w_ref[...], preferred_element_type=jnp.float32
    )


# ---------------------------------------------------------------------------
# Wrapper
# ---------------------------------------------------------------------------

_VMEM_LIMIT = 48 * 1024 * 1024      # stays within v7x's 64 MiB VMEM
_TILE_BUDGET = 24 * 1024 * 1024     # headroom under the scoped limit


def _tile_working_set_bytes(tm, tk, tn):
    # Double-buffered bf16 x / w tiles + double-buffered f32 output + bias.
    return 2 * (tm * tk + tk * tn) * 2 + 2 * tm * tn * 4 + 2 * tn * 4


def linear_projection(x2d, w_p, b):
    """x2d: [B, D] float, w_p: [Kp, H] bf16 (K zero-padded), b: [1, H] f32.

    Returns [B, H] f32 = x2d @ w + b with f32 accumulation on the MXU.
    No host-side padding of the activation on the common (D % 128 == 0) path.
    """
    B, D = x2d.shape
    Kp, H = w_p.shape

    x = x2d.astype(jnp.bfloat16)
    if D != Kp:
        # Rare path (D not a multiple of 128): zero-pad K so it matches w_p.
        x = jnp.pad(x, ((0, 0), (0, Kp - D)))

    # --- tile selection -----------------------------------------------------
    # M: full-extent block (no batch padding); tile only when 128-aligned.
    tm = 128 if (B % 128 == 0 and B > 128) else B
    # N: keep a small / non-lane-aligned hidden dim as one full-extent block
    #    (avoids padding the weight and inflating HBM reads); tile if aligned.
    if H % 128 == 0 and H > 256:
        tn = 256 if H % 256 == 0 else 128
    else:
        tn = H
    # K: collapse the reduction axis whenever the slab fits the VMEM budget.
    tk = Kp
    while _tile_working_set_bytes(tm, tk, tn) > _TILE_BUDGET and tk % 256 == 0:
        tk //= 2

    grid_m = pl.cdiv(B, tm)
    grid_n = pl.cdiv(H, tn)
    grid_k = Kp // tk

    flops = 2 * B * Kp * H
    bytes_accessed = (
        B * Kp * 2 * grid_n        # x re-read once per N tile
        + Kp * H * 2 * grid_m      # w re-read once per M tile
        + H * 4 * grid_m           # bias re-read once per M tile
        + B * H * 4                # output writeback
    )
    cost = pl.CostEstimate(
        flops=flops, transcendentals=0, bytes_accessed=bytes_accessed
    )

    if grid_k == 1:
        # Collapsed-K fast path (the one taken at WrapModule's demo shape).
        return pl.pallas_call(
            _linear_kernel,
            out_shape=jax.ShapeDtypeStruct((B, H), jnp.float32),
            grid_spec=pltpu.PrefetchScalarGridSpec(
                num_scalar_prefetch=0,
                grid=(grid_m, grid_n),
                in_specs=[
                    pl.BlockSpec((tm, tk), lambda i, j: (i, 0)),
                    pl.BlockSpec((tk, tn), lambda i, j: (0, j)),
                    pl.BlockSpec((1, tn), lambda i, j: (0, j)),
                ],
                out_specs=pl.BlockSpec((tm, tn), lambda i, j: (i, j)),
            ),
            compiler_params=pltpu.CompilerParams(
                dimension_semantics=("parallel", "parallel"),
                vmem_limit_bytes=_VMEM_LIMIT,
            ),
            cost_estimate=cost,
        )(x, w_p, b)

    # Fallback: K too large for one slab — reduce over k, accumulating into
    # the resident f32 output block (no separate accumulator scratch).
    return pl.pallas_call(
        _linear_ksplit_kernel,
        out_shape=jax.ShapeDtypeStruct((B, H), jnp.float32),
        grid_spec=pltpu.PrefetchScalarGridSpec(
            num_scalar_prefetch=0,
            grid=(grid_m, grid_n, grid_k),
            in_specs=[
                pl.BlockSpec((tm, tk), lambda i, j, k: (i, k)),
                pl.BlockSpec((tk, tn), lambda i, j, k: (k, j)),
                pl.BlockSpec((1, tn), lambda i, j, k: (0, j)),
            ],
            out_specs=pl.BlockSpec((tm, tn), lambda i, j, k: (i, j)),
        ),
        compiler_params=pltpu.CompilerParams(
            dimension_semantics=("parallel", "parallel", "arbitrary"),
            vmem_limit_bytes=_VMEM_LIMIT,
        ),
        cost_estimate=cost,
    )(x, w_p, b)


class WrapModuleJax:
    """JAX/Pallas equivalent of WrapModule(model) with a synthetic inner model."""

    def __init__(self, in_features, hidden, key):
        kw, kb = jax.random.split(key)
        self.in_features = in_features
        # Deterministic synthetic inner-model parameters.
        w_f32 = (
            jax.random.normal(kw, (in_features, hidden), jnp.float32)
            * (1.0 / jnp.sqrt(jnp.float32(in_features)))
        )
        # Padding (K -> multiple of 128) and bf16 cast done ONCE here, not per
        # forward call. Hidden dim is left unpadded (full-extent N block).
        Kp = _round_up(in_features, 128)
        w_p = jnp.zeros((Kp, hidden), jnp.bfloat16)
        self.w_p = w_p.at[:in_features, :].set(w_f32.astype(jnp.bfloat16))
        self.b = jax.random.normal(kb, (1, hidden), jnp.float32) * 0.01

    def __call__(self, pixel_values):
        # pixel_values: NCHW [B, C, H, W]
        B = pixel_values.shape[0]
        x2d = pixel_values.reshape(B, -1)
        res = linear_projection(x2d, self.w_p, self.b)   # [B, hidden] (2-D)
        # WrapModule.forward: if the inner result is 2-D, unsqueeze the seq dim.
        if res.ndim == 2:
            res = res[:, None, :]                        # [B, 1, hidden]
        return {"last_hidden_state": res}


if __name__ == "__main__":
    key = jax.random.PRNGKey(0)
    k_in, k_params = jax.random.split(key)

    B, C, Hs, Ws = 2, 4, 16, 16
    hidden = 32
    pixel_values = jax.random.normal(k_in, (B, C, Hs, Ws), jnp.float32)

    module = WrapModuleJax(in_features=C * Hs * Ws, hidden=hidden, key=k_params)
    out = module(pixel_values)
    last_hidden = jax.block_until_ready(out["last_hidden_state"])

    # Reference computed with the same bf16-inputs / f32-accumulation recipe.
    x2d = pixel_values.reshape(B, -1).astype(jnp.bfloat16)
    ref = (
        jnp.dot(x2d, module.w_p[: C * Hs * Ws], preferred_element_type=jnp.float32)
        + module.b
    )
    ref = ref[:, None, :]
    assert last_hidden.shape == (B, 1, hidden), last_hidden.shape
    assert jnp.allclose(last_hidden, ref, atol=1e-3, rtol=1e-3)

    print("KERNEL_OK")
</pallas_src>

<mosaic_0001>
module attributes {stable_mosaic.version = 11 : i64} {
  func.func @_linear_kernel(%arg0: i32, %arg1: i32, %arg2: memref<2x1024xbf16, #tpu.memory_space<vmem>>, %arg3: memref<1024x32xbf16, #tpu.memory_space<vmem>>, %arg4: memref<1x32xf32, #tpu.memory_space<vmem>>, %arg5: memref<2x32xf32, #tpu.memory_space<vmem>>) attributes {dimension_semantics = [#tpu.dimension_semantics<parallel>, #tpu.dimension_semantics<parallel>], iteration_bounds = array<i64: 1, 1>, scalar_prefetch = 0 : i64, scratch_operands = 0 : i64, tpu.core_type = #tpu.core_type<tc>, window_params = [{transform_indices = @transform_0, window_bounds = array<i64: 2, 1024>}, {transform_indices = @transform_1, window_bounds = array<i64: 1024, 32>}, {transform_indices = @transform_2, window_bounds = array<i64: 1, 32>}, {transform_indices = @transform_3, window_bounds = array<i64: 2, 32>}]} {
    %c0 = arith.constant 0 : index
    %c0_0 = arith.constant 0 : index
    %0 = vector.load %arg2[%c0, %c0_0] : memref<2x1024xbf16, #tpu.memory_space<vmem>>, vector<2x1024xbf16>
    %c0_1 = arith.constant 0 : index
    %c0_2 = arith.constant 0 : index
    %1 = vector.load %arg3[%c0_1, %c0_2] : memref<1024x32xbf16, #tpu.memory_space<vmem>>, vector<1024x32xbf16>
    %cst = arith.constant dense<0.000000e+00> : vector<2x32xf32>
    %2 = tpu.matmul %0, %1, %cst {dimension_numbers = #tpu.dot_dimension_numbers<[1], [0], [0], [1], [0, 0, 1, 1], [], []>} : vector<2x1024xbf16>, vector<1024x32xbf16>, vector<2x32xf32> -> vector<2x32xf32>
    %c0_3 = arith.constant 0 : index
    %c0_4 = arith.constant 0 : index
    %3 = vector.load %arg4[%c0_3, %c0_4] : memref<1x32xf32, #tpu.memory_space<vmem>>, vector<1x32xf32>
    %4 = vector.broadcast %3 : vector<1x32xf32> to vector<2x32xf32>
    %5 = arith.addf %2, %4 : vector<2x32xf32>
    %c0_5 = arith.constant 0 : index
    %c0_6 = arith.constant 0 : index
    %6 = vector.load %arg5[%c0_5, %c0_6] : memref<2x32xf32, #tpu.memory_space<vmem>>, vector<2x32xf32>
    tpu.vector_store %arg5[%c0_5, %c0_6], %5 {strides = array<i32>} : memref<2x32xf32, #tpu.memory_space<vmem>>, vector<2x32xf32>,
    return
  }
  func.func @transform_0(%arg0: i32, %arg1: i32) -> (i32, i32) {
    %c0_i32 = arith.constant 0 : i32
    %c0_i32_0 = arith.constant 0 : i32
    return %arg0, %c0_i32 : i32, i32
  }
  func.func @transform_1(%arg0: i32, %arg1: i32) -> (i32, i32) {
    %c0_i32 = arith.constant 0 : i32
    %c0_i32_0 = arith.constant 0 : i32
    return %c0_i32, %arg1 : i32, i32
  }
  func.func @transform_2(%arg0: i32, %arg1: i32) -> (i32, i32) {
    %c0_i32 = arith.constant 0 : i32
    %c0_i32_0 = arith.constant 0 : i32
    return %c0_i32, %arg1 : i32, i32
  }
  func.func @transform_3(%arg0: i32, %arg1: i32) -> (i32, i32) {
    %c0_i32 = arith.constant 0 : i32
    return %arg0, %arg1 : i32, i32
  }
}

</mosaic_0001>

<llo_original>
// kernel: tpu_custom_call.1
$region0: #{tpu_custom_call.1}
  #allocation0 [shape = 'u32[]', space=smem, size = 0x4, offset = 0x4, fixed_abs, tag = 'smem constant byte address 0x4 - core index']
  #allocation1 [shape = 'u32[144,128]{1,0:T(1,128)}', space=vmem, size = 0x12000, scoped, tag = 'internal scratch']
  %s0 = inlined_call_operand.vmem [shape: bf16[2,1024], index: 0, kind: input, shape index: {}]
  %s1 = inlined_call_operand.vmem [shape: bf16[1024,32], index: 1, kind: input, shape index: {}]
  %s2 = inlined_call_operand.vmem [shape: f32[1,32], index: 2, kind: input, shape index: {}]
  %s3 = inlined_call_operand.hbm [shape: f32[2,32], index: 3, kind: output, shape index: {}]
  %s4 = sld [smem:[#allocation0]]
  $region22: #{tpu_custom_call.1} parent=0
    _
  %s6 = ssub.s32 1, %s4
  %s7 = scalar_select 0, %s6, %s4
  $region1: #{tpu_custom_call.1} parent=0
    #allocation2 [shape = 'u8[1024]{0}', space=vmem, size = 0x400, scoped, tag = 'output window, operand 0, single buffered']
    #allocation3 [shape = 's32[1]{0}', space=sflag, size = 0x4, scoped, tag = 'scoped memory for tpu_custom_call.1']
    %8 = vsyncpa [#allocation3], 0
    // Predicated region
    $region2: #{tpu_custom_call.1} parent=1 // pred_check
      _
    $region3: #{tpu_custom_call.1} parent=1 // pred_check_branch
      %10 = sbr.rel (0) target = $region5
    $region4: #{tpu_custom_call.1} parent=1 // pred_region
      _
    $region5: #{tpu_custom_call.1} parent=1 // pred_fallthru
      _
    // Predicated region
    $region6: #{tpu_custom_call.1} parent=1 // pred_check
      _
    $region7: #{tpu_custom_call.1} parent=1 // pred_check_branch
      %12 = sbr.rel (0) target = $region9
    $region8: #{tpu_custom_call.1} parent=1 // pred_region
      _
    $region9: #{tpu_custom_call.1} parent=1 // pred_fallthru
      _
    // Predicated region
    $region10: #{tpu_custom_call.1} parent=1 // pred_check
      _
    $region11: #{tpu_custom_call.1} parent=1 // pred_check_branch
      %14 = sbr.rel (0) target = $region13
    $region12: #{tpu_custom_call.1} parent=1 // pred_region
      _
    $region13: #{tpu_custom_call.1} parent=1 // pred_fallthru
      _
    %v16 = vld [vmem:[%s0] sm:$0xff]
    %v17 = vld [vmem:[%s1] sm:$0xf]
    %v18 = vld [vmem:[%s1 + $0x4] sm:$0xf]
    %v19 = vld [vmem:[%s1 + $0x8] sm:$0xf]
    %v20 = vld [vmem:[%s1 + $0xc] sm:$0xf]
    %v21 = vld [vmem:[%s1 + $0x10] sm:$0xf]
    %v22 = vld [vmem:[%s1 + $0x14] sm:$0xf]
    %v23 = vld [vmem:[%s1 + $0x18] sm:$0xf]
    %v24 = vld [vmem:[%s1 + $0x1c] sm:$0xf]
    %v25 = vld [vmem:[%s1 + $0x20] sm:$0xf]
    %v26 = vld [vmem:[%s1 + $0x24] sm:$0xf]
    %v27 = vld [vmem:[%s1 + $0x28] sm:$0xf]
    %v28 = vld [vmem:[%s1 + $0x2c] sm:$0xf]
    %v29 = vld [vmem:[%s1 + $0x30] sm:$0xf]
    %v30 = vld [vmem:[%s1 + $0x34] sm:$0xf]
    %v31 = vld [vmem:[%s1 + $0x38] sm:$0xf]
    %v32 = vld [vmem:[%s1 + $0x3c] sm:$0xf]
    %v33 = vld [vmem:[%s1 + $0x40] sm:$0xf]
    %v34 = vld [vmem:[%s1 + $0x44] sm:$0xf]
    %v35 = vld [vmem:[%s1 + $0x48] sm:$0xf]
    %v36 = vld [vmem:[%s1 + $0x4c] sm:$0xf]
    %v37 = vld [vmem:[%s1 + $0x50] sm:$0xf]
    %v38 = vld [vmem:[%s1 + $0x54] sm:$0xf]
    %v39 = vld [vmem:[%s1 + $0x58] sm:$0xf]
    %v40 = vld [vmem:[%s1 + $0x5c] sm:$0xf]
    %v41 = vld [vmem:[%s1 + $0x60] sm:$0xf]
    %v42 = vld [vmem:[%s1 + $0x64] sm:$0xf]
    %v43 = vld [vmem:[%s1 + $0x68] sm:$0xf]
    %v44 = vld [vmem:[%s1 + $0x6c] sm:$0xf]
    %v45 = vld [vmem:[%s1 + $0x70] sm:$0xf]
    %v46 = vld [vmem:[%s1 + $0x74] sm:$0xf]
    %v47 = vld [vmem:[%s1 + $0x78] sm:$0xf]
    %v48 = vld [vmem:[%s1 + $0x7c] sm:$0xf]
    %v49 = vld [vmem:[%s1 + $0x80] sm:$0xf]
    %v50 = vld [vmem:[%s1 + $0x84] sm:$0xf]
    %v51 = vld [vmem:[%s1 + $0x88] sm:$0xf]
    %v52 = vld [vmem:[%s1 + $0x8c] sm:$0xf]
    %v53 = vld [vmem:[%s1 + $0x90] sm:$0xf]
    %v54 = vld [vmem:[%s1 + $0x94] sm:$0xf]
    %v55 = vld [vmem:[%s1 + $0x98] sm:$0xf]
    %v56 = vld [vmem:[%s1 + $0x9c] sm:$0xf]
    %v57 = vld [vmem:[%s1 + $0xa0] sm:$0xf]
    %v58 = vld [vmem:[%s1 + $0xa4] sm:$0xf]
    %v59 = vld [vmem:[%s1 + $0xa8] sm:$0xf]
    %v60 = vld [vmem:[%s1 + $0xac] sm:$0xf]
    %v61 = vld [vmem:[%s1 + $0xb0] sm:$0xf]
    %v62 = vld [vmem:[%s1 + $0xb4] sm:$0xf]
    %v63 = vld [vmem:[%s1 + $0xb8] sm:$0xf]
    %v64 = vld [vmem:[%s1 + $0xbc] sm:$0xf]
    %v65 = vld [vmem:[%s1 + $0xc0] sm:$0xf]
    %v66 = vld [vmem:[%s1 + $0xc4] sm:$0xf]
    %v67 = vld [vmem:[%s1 + $0xc8] sm:$0xf]
    %v68 = vld [vmem:[%s1 + $0xcc] sm:$0xf]
    %v69 = vld [vmem:[%s1 + $0xd0] sm:$0xf]
    %v70 = vld [vmem:[%s1 + $0xd4] sm:$0xf]
    %v71 = vld [vmem:[%s1 + $0xd8] sm:$0xf]
    %v72 = vld [vmem:[%s1 + $0xdc] sm:$0xf]
    %v73 = vld [vmem:[%s1 + $0xe0] sm:$0xf]
    %v74 = vld [vmem:[%s1 + $0xe4] sm:$0xf]
    %v75 = vld [vmem:[%s1 + $0xe8] sm:$0xf]
    %v76 = vld [vmem:[%s1 + $0xec] sm:$0xf]
    %v77 = vld [vmem:[%s1 + $0xf0] sm:$0xf]
    %v78 = vld [vmem:[%s1 + $0xf4] sm:$0xf]
    %v79 = vld [vmem:[%s1 + $0xf8] sm:$0xf]
    %v80 = vld [vmem:[%s1 + $0xfc] sm:$0xf]
    %v81 = vld [vmem:[%s1 + $0x100] sm:$0xf]
    %v82 = vld [vmem:[%s1 + $0x104] sm:$0xf]
    %v83 = vld [vmem:[%s1 + $0x108] sm:$0xf]
    %v84 = vld [vmem:[%s1 + $0x10c] sm:$0xf]
    %v85 = vld [vmem:[%s1 + $0x110] sm:$0xf]
    %v86 = vld [vmem:[%s1 + $0x114] sm:$0xf]
    %v87 = vld [vmem:[%s1 + $0x118] sm:$0xf]
    %v88 = vld [vmem:[%s1 + $0x11c] sm:$0xf]
    %v89 = vld [vmem:[%s1 + $0x120] sm:$0xf]
    %v90 = vld [vmem:[%s1 + $0x124] sm:$0xf]
    %v91 = vld [vmem:[%s1 + $0x128] sm:$0xf]
    %v92 = vld [vmem:[%s1 + $0x12c] sm:$0xf]
    %v93 = vld [vmem:[%s1 + $0x130] sm:$0xf]
    %v94 = vld [vmem:[%s1 + $0x134] sm:$0xf]
    %v95 = vld [vmem:[%s1 + $0x138] sm:$0xf]
    %v96 = vld [vmem:[%s1 + $0x13c] sm:$0xf]
    %v97 = vld [vmem:[%s1 + $0x140] sm:$0xf]
    %v98 = vld [vmem:[%s1 + $0x144] sm:$0xf]
    %v99 = vld [vmem:[%s1 + $0x148] sm:$0xf]
    %v100 = vld [vmem:[%s1 + $0x14c] sm:$0xf]
    %v101 = vld [vmem:[%s1 + $0x150] sm:$0xf]
    %v102 = vld [vmem:[%s1 + $0x154] sm:$0xf]
    %v103 = vld [vmem:[%s1 + $0x158] sm:$0xf]
    %v104 = vld [vmem:[%s1 + $0x15c] sm:$0xf]
    %v105 = vld [vmem:[%s1 + $0x160] sm:$0xf]
    %v106 = vld [vmem:[%s1 + $0x164] sm:$0xf]
    %v107 = vld [vmem:[%s1 + $0x168] sm:$0xf]
    %v108 = vld [vmem:[%s1 + $0x16c] sm:$0xf]
    %v109 = vld [vmem:[%s1 + $0x170] sm:$0xf]
    %v110 = vld [vmem:[%s1 + $0x174] sm:$0xf]
    %v111 = vld [vmem:[%s1 + $0x178] sm:$0xf]
    %v112 = vld [vmem:[%s1 + $0x17c] sm:$0xf]
    %v113 = vld [vmem:[%s1 + $0x180] sm:$0xf]
    %v114 = vld [vmem:[%s1 + $0x184] sm:$0xf]
    %v115 = vld [vmem:[%s1 + $0x188] sm:$0xf]
    %v116 = vld [vmem:[%s1 + $0x18c] sm:$0xf]
    %v117 = vld [vmem:[%s1 + $0x190] sm:$0xf]
    %v118 = vld [vmem:[%s1 + $0x194] sm:$0xf]
    %v119 = vld [vmem:[%s1 + $0x198] sm:$0xf]
    %v120 = vld [vmem:[%s1 + $0x19c] sm:$0xf]
    %v121 = vld [vmem:[%s1 + $0x1a0] sm:$0xf]
    %v122 = vld [vmem:[%s1 + $0x1a4] sm:$0xf]
    %v123 = vld [vmem:[%s1 + $0x1a8] sm:$0xf]
    %v124 = vld [vmem:[%s1 + $0x1ac] sm:$0xf]
    %v125 = vld [vmem:[%s1 + $0x1b0] sm:$0xf]
    %v126 = vld [vmem:[%s1 + $0x1b4] sm:$0xf]
    %v127 = vld [vmem:[%s1 + $0x1b8] sm:$0xf]
    %v128 = vld [vmem:[%s1 + $0x1bc] sm:$0xf]
    %v129 = vld [vmem:[%s1 + $0x1c0] sm:$0xf]
    %v130 = vld [vmem:[%s1 + $0x1c4] sm:$0xf]
    %v131 = vld [vmem:[%s1 + $0x1c8] sm:$0xf]
    %v132 = vld [vmem:[%s1 + $0x1cc] sm:$0xf]
    %v133 = vld [vmem:[%s1 + $0x1d0] sm:$0xf]
    %v134 = vld [vmem:[%s1 + $0x1d4] sm:$0xf]
    %v135 = vld [vmem:[%s1 + $0x1d8] sm:$0xf]
    %v136 = vld [vmem:[%s1 + $0x1dc] sm:$0xf]
    %v137 = vld [vmem:[%s1 + $0x1e0] sm:$0xf]
    %v138 = vld [vmem:[%s1 + $0x1e4] sm:$0xf]
    %v139 = vld [vmem:[%s1 + $0x1e8] sm:$0xf]
    %v140 = vld [vmem:[%s1 + $0x1ec] sm:$0xf]
    %v141 = vld [vmem:[%s1 + $0x1f0] sm:$0xf]
    %v142 = vld [vmem:[%s1 + $0x1f4] sm:$0xf]
    %v143 = vld [vmem:[%s1 + $0x1f8] sm:$0xf]
    %v144 = vld [vmem:[%s1 + $0x1fc] sm:$0xf]
    %v145 = vld [vmem:[%s2] sm:$0x1]
    %v147 = vlaneseq
    %v148 = vshrl.u32 %v147, 7
    %v149 = vsub.s32 0, %v148
    %v150 = vrot.slane %v145, %v149
    %v153 = vcombine.high %v16, %v16
    %v155 = vunpack.c.l.s4 1966171168
    %v156 = vunpack.c.0.s8 %v155
    %v157 = vlaneseq
    %v158 = vshrl.u32 %v157, 7
    %v159 = vsub.s32 %v156, %v158
    %v160 = vrot.slane %v16, %v159
    %v162 = vunpack.c.l.s4 1966171168
    %v163 = vunpack.c.0.s8 %v162
    %v164 = vlaneseq
    %v165 = vshrl.u32 %v164, 7
    %v166 = vsub.s32 %v163, %v165
    %v167 = vrot.slane %v153, %v166
    %v168 = vcombine.high %v160, %v160
    %v169 = vcombine.high %v167, %v167
    %v171 = vunpack.c.l.s4 1966171168
    %v172 = vunpack.c.0.s8 %v171
    %v173 = vlaneseq
    %v174 = vshrl.u32 %v173, 7
    %v175 = vsub.s32 %v172, %v174
    %v176 = vrot.slane %v160, %v175
    %v178 = vunpack.c.l.s4 1966171168
    %v179 = vunpack.c.0.s8 %v178
    %v180 = vlaneseq
    %v181 = vshrl.u32 %v180, 7
    %v182 = vsub.s32 %v179, %v181
    %v183 = vrot.slane %v167, %v182
    %v185 = vunpack.c.l.s4 1966171168
    %v186 = vunpack.c.0.s8 %v185
    %v187 = vlaneseq
    %v188 = vshrl.u32 %v187, 7
    %v189 = vsub.s32 %v186, %v188
    %v190 = vrot.slane %v168, %v189
    %v192 = vunpack.c.l.s4 1966171168
    %v193 = vunpack.c.0.s8 %v192
    %v194 = vlaneseq
    %v195 = vshrl.u32 %v194, 7
    %v196 = vsub.s32 %v193, %v195
    %v197 = vrot.slane %v169, %v196
    %v198 = vcombine.high %v176, %v176
    %v199 = vcombine.high %v183, %v183
    %v200 = vcombine.high %v190, %v190
    %v201 = vcombine.high %v197, %v197
    %v338 = vunpack.c.l.b16 %v17
    %v339 = vunpack.c.l.b16 %v18
    %v340 = vunpack.c.l.b16 %v19
    %v341 = vunpack.c.l.b16 %v20
    %v342 = vunpack.c.l.b16 %v21
    %v343 = vunpack.c.l.b16 %v22
    %v344 = vunpack.c.l.b16 %v23
    %v345 = vunpack.c.l.b16 %v24
    %v346 = vunpack.c.l.b16 %v25
    %v347 = vunpack.c.l.b16 %v26
    %v348 = vunpack.c.l.b16 %v27
    %v349 = vunpack.c.l.b16 %v28
    %v350 = vunpack.c.l.b16 %v29
    %v351 = vunpack.c.l.b16 %v30
    %v352 = vunpack.c.l.b16 %v31
    %v353 = vunpack.c.l.b16 %v32
    %v354 = vunpack.c.l.b16 %v33
    %v355 = vunpack.c.l.b16 %v34
    %v356 = vunpack.c.l.b16 %v35
    %v357 = vunpack.c.l.b16 %v36
    %v358 = vunpack.c.l.b16 %v37
    %v359 = vunpack.c.l.b16 %v38
    %v360 = vunpack.c.l.b16 %v39
    %v361 = vunpack.c.l.b16 %v40
    %v362 = vunpack.c.l.b16 %v41
    %v363 = vunpack.c.l.b16 %v42
    %v364 = vunpack.c.l.b16 %v43
    %v365 = vunpack.c.l.b16 %v44
    %v366 = vunpack.c.l.b16 %v45
    %v367 = vunpack.c.l.b16 %v46
    %v368 = vunpack.c.l.b16 %v47
    %v369 = vunpack.c.l.b16 %v48
    %v370 = vunpack.c.l.b16 %v49
    %v371 = vunpack.c.l.b16 %v50
    %v372 = vunpack.c.l.b16 %v51
    %v373 = vunpack.c.l.b16 %v52
    %v374 = vunpack.c.l.b16 %v53
    %v375 = vunpack.c.l.b16 %v54
    %v376 = vunpack.c.l.b16 %v55
    %v377 = vunpack.c.l.b16 %v56
    %v378 = vunpack.c.l.b16 %v57
    %v379 = vunpack.c.l.b16 %v58
    %v380 = vunpack.c.l.b16 %v59
    %v381 = vunpack.c.l.b16 %v60
    %v382 = vunpack.c.l.b16 %v61
    %v383 = vunpack.c.l.b16 %v62
    %v384 = vunpack.c.l.b16 %v63
    %v385 = vunpack.c.l.b16 %v64
    %v386 = vunpack.c.l.b16 %v65
    %v387 = vunpack.c.l.b16 %v66
    %v388 = vunpack.c.l.b16 %v67
    %v389 = vunpack.c.l.b16 %v68
    %v390 = vunpack.c.l.b16 %v69
    %v391 = vunpack.c.l.b16 %v70
    %v392 = vunpack.c.l.b16 %v71
    %v393 = vunpack.c.l.b16 %v72
    %v394 = vunpack.c.l.b16 %v73
    %v395 = vunpack.c.l.b16 %v74
    %v396 = vunpack.c.l.b16 %v75
    %v397 = vunpack.c.l.b16 %v76
    %v398 = vunpack.c.l.b16 %v77
    %v399 = vunpack.c.l.b16 %v78
    %v400 = vunpack.c.l.b16 %v79
    %v401 = vunpack.c.l.b16 %v80
    %v402 = vunpack.c.l.b16 %v81
    %v403 = vunpack.c.l.b16 %v82
    %v404 = vunpack.c.l.b16 %v83
    %v405 = vunpack.c.l.b16 %v84
    %v406 = vunpack.c.l.b16 %v85
    %v407 = vunpack.c.l.b16 %v86
    %v408 = vunpack.c.l.b16 %v87
    %v409 = vunpack.c.l.b16 %v88
    %v410 = vunpack.c.l.b16 %v89
    %v411 = vunpack.c.l.b16 %v90
    %v412 = vunpack.c.l.b16 %v91
    %v413 = vunpack.c.l.b16 %v92
    %v414 = vunpack.c.l.b16 %v93
    %v415 = vunpack.c.l.b16 %v94
    %v416 = vunpack.c.l.b16 %v95
    %v417 = vunpack.c.l.b16 %v96
    %v418 = vunpack.c.l.b16 %v97
    %v419 = vunpack.c.l.b16 %v98
    %v420 = vunpack.c.l.b16 %v99
    %v421 = vunpack.c.l.b16 %v100
    %v422 = vunpack.c.l.b16 %v101
    %v423 = vunpack.c.l.b16 %v102
    %v424 = vunpack.c.l.b16 %v103
    %v425 = vunpack.c.l.b16 %v104
    %v426 = vunpack.c.l.b16 %v105
    %v427 = vunpack.c.l.b16 %v106
    %v428 = vunpack.c.l.b16 %v107
    %v429 = vunpack.c.l.b16 %v108
    %v430 = vunpack.c.l.b16 %v109
    %v431 = vunpack.c.l.b16 %v110
    %v432 = vunpack.c.l.b16 %v111
    %v433 = vunpack.c.l.b16 %v112
    %v434 = vunpack.c.l.b16 %v113
    %v435 = vunpack.c.l.b16 %v114
    %v436 = vunpack.c.l.b16 %v115
    %v437 = vunpack.c.l.b16 %v116
    %v438 = vunpack.c.l.b16 %v117
    %v439 = vunpack.c.l.b16 %v118
    %v440 = vunpack.c.l.b16 %v119
    %v441 = vunpack.c.l.b16 %v120
    %v442 = vunpack.c.l.b16 %v121
    %v443 = vunpack.c.l.b16 %v122
    %v444 = vunpack.c.l.b16 %v123
    %v445 = vunpack.c.l.b16 %v124
    %v446 = vunpack.c.l.b16 %v125
    %v447 = vunpack.c.l.b16 %v126
    %v448 = vunpack.c.l.b16 %v127
    %v449 = vunpack.c.l.b16 %v128
    %v450 = vunpack.c.l.b16 %v129
    %v451 = vunpack.c.l.b16 %v130
    %v452 = vunpack.c.l.b16 %v131
    %v453 = vunpack.c.l.b16 %v132
    %v454 = vunpack.c.l.b16 %v133
    %v455 = vunpack.c.l.b16 %v134
    %v456 = vunpack.c.l.b16 %v135
    %v457 = vunpack.c.l.b16 %v136
    %v458 = vunpack.c.l.b16 %v137
    %v459 = vunpack.c.l.b16 %v138
    %v460 = vunpack.c.l.b16 %v139
    %v461 = vunpack.c.l.b16 %v140
    %v462 = vunpack.c.l.b16 %v141
    %v463 = vunpack.c.l.b16 %v142
    %v464 = vunpack.c.l.b16 %v143
    %v465 = vunpack.c.l.b16 %v144
    %v466 = vpack.c.b16 %v339, %v338
    %v467 = vpack.c.b16 %v341, %v340
    %v468 = vpack.c.b16 %v343, %v342
    %v469 = vpack.c.b16 %v345, %v344
    %v470 = vpack.c.b16 %v347, %v346
    %v471 = vpack.c.b16 %v349, %v348
    %v472 = vpack.c.b16 %v351, %v350
    %v473 = vpack.c.b16 %v353, %v352
    %v474 = vpack.c.b16 %v355, %v354
    %v475 = vpack.c.b16 %v357, %v356
    %v476 = vpack.c.b16 %v359, %v358
    %v477 = vpack.c.b16 %v361, %v360
    %v478 = vpack.c.b16 %v363, %v362
    %v479 = vpack.c.b16 %v365, %v364
    %v480 = vpack.c.b16 %v367, %v366
    %v481 = vpack.c.b16 %v369, %v368
    %v482 = vpack.c.b16 %v371, %v370
    %v483 = vpack.c.b16 %v373, %v372
    %v484 = vpack.c.b16 %v375, %v374
    %v485 = vpack.c.b16 %v377, %v376
    %v486 = vpack.c.b16 %v379, %v378
    %v487 = vpack.c.b16 %v381, %v380
    %v488 = vpack.c.b16 %v383, %v382
    %v489 = vpack.c.b16 %v385, %v384
    %v490 = vpack.c.b16 %v387, %v386
    %v491 = vpack.c.b16 %v389, %v388
    %v492 = vpack.c.b16 %v391, %v390
    %v493 = vpack.c.b16 %v393, %v392
    %v494 = vpack.c.b16 %v395, %v394
    %v495 = vpack.c.b16 %v397, %v396
    %v496 = vpack.c.b16 %v399, %v398
    %v497 = vpack.c.b16 %v401, %v400
    %v498 = vpack.c.b16 %v403, %v402
    %v499 = vpack.c.b16 %v405, %v404
    %v500 = vpack.c.b16 %v407, %v406
    %v501 = vpack.c.b16 %v409, %v408
    %v502 = vpack.c.b16 %v411, %v410
    %v503 = vpack.c.b16 %v413, %v412
    %v504 = vpack.c.b16 %v415, %v414
    %v505 = vpack.c.b16 %v417, %v416
    %v506 = vpack.c.b16 %v419, %v418
    %v507 = vpack.c.b16 %v421, %v420
    %v508 = vpack.c.b16 %v423, %v422
    %v509 = vpack.c.b16 %v425, %v424
    %v510 = vpack.c.b16 %v427, %v426
    %v511 = vpack.c.b16 %v429, %v428
    %v512 = vpack.c.b16 %v431, %v430
    %v513 = vpack.c.b16 %v433, %v432
    %v514 = vpack.c.b16 %v435, %v434
    %v515 = vpack.c.b16 %v437, %v436
    %v516 = vpack.c.b16 %v439, %v438
    %v517 = vpack.c.b16 %v441, %v440
    %v518 = vpack.c.b16 %v443, %v442
    %v519 = vpack.c.b16 %v445, %v444
    %v520 = vpack.c.b16 %v447, %v446
    %v521 = vpack.c.b16 %v449, %v448
    %v522 = vpack.c.b16 %v451, %v450
    %v523 = vpack.c.b16 %v453, %v452
    %v524 = vpack.c.b16 %v455, %v454
    %v525 = vpack.c.b16 %v457, %v456
    %v526 = vpack.c.b16 %v459, %v458
    %v527 = vpack.c.b16 %v461, %v460
    %v528 = vpack.c.b16 %v463, %v462
    %v529 = vpack.c.b16 %v465, %v464
    %594 = vmatprep.subr.bf16.mxu0 0
    %595 = vmatpush1.bf16.msra.mxu0 %v466
    %596 = vmatprep.subr.bf16.mxu0 0
    %597 = vmatpush1.bf16.msra.mxu0 %v467
    %598 = vmatprep.subr.bf16.mxu0 0
    %599 = vmatpush1.bf16.msra.mxu0 %v468
    %600 = vmatprep.subr.bf16.mxu0 0
    %601 = vmatpush1.bf16.msra.mxu0 %v469
    %602 = vmatprep.subr.bf16.mxu0 0
    %603 = vmatpush1.bf16.msra.mxu0 %v470
    %604 = vmatprep.subr.bf16.mxu0 0
    %605 = vmatpush1.bf16.msra.mxu0 %v471
    %606 = vmatprep.subr.bf16.mxu0 0
    %607 = vmatpush1.bf16.msra.mxu0 %v472
    %608 = vmatprep.subr.bf16.mxu0 0
    %609 = vmatpush1.bf16.msra.mxu0 %v473
    %610 = vmatprep.subr.bf16.mxu0 0
    %611 = vmatpush1.bf16.msra.mxu0 %v474
    %612 = vmatprep.subr.bf16.mxu0 0
    %613 = vmatpush1.bf16.msra.mxu0 %v475
    %614 = vmatprep.subr.bf16.mxu0 0
    %615 = vmatpush1.bf16.msra.mxu0 %v476
    %616 = vmatprep.subr.bf16.mxu0 0
    %617 = vmatpush1.bf16.msra.mxu0 %v477
    %618 = vmatprep.subr.bf16.mxu0 0
    %619 = vmatpush1.bf16.msra.mxu0 %v478
    %620 = vmatprep.subr.bf16.mxu0 0
    %621 = vmatpush1.bf16.msra.mxu0 %v479
    %622 = vmatprep.subr.bf16.mxu0 0
    %623 = vmatpush1.bf16.msra.mxu0 %v480
    %624 = vmatprep.subr.bf16.mxu0 0
    %625 = vmatpush1.bf16.msra.mxu0 %v481
    %626 = vmatprep.mubr.bf16.mxu0 %v190
    %627 = vmatmul.mubr.bf16.gmra.mrb[0].mxu0 %v176
    %v628 = vpop.f32.mrb[0].mxu0
    %v629 = vadd.f32 %v150, %v628
    %v630 = vpop.f32.mrb[0].mxu0
    %v631 = vpop.f32.mrb[0].mxu0
    %v632 = vpop.f32.mrb[0].mxu0
    %633 = vdwg.mxu0
    %634 = vmatprep.subr.bf16.mxu0 0
    %635 = vmatpush1.bf16.msra.mxu0 %v482
    %636 = vmatprep.subr.bf16.mxu0 0
    %637 = vmatpush1.bf16.msra.mxu0 %v483
    %638 = vmatprep.subr.bf16.mxu0 0
    %639 = vmatpush1.bf16.msra.mxu0 %v484
    %640 = vmatprep.subr.bf16.mxu0 0
    %641 = vmatpush1.bf16.msra.mxu0 %v485
    %642 = vmatprep.subr.bf16.mxu0 0
    %643 = vmatpush1.bf16.msra.mxu0 %v486
    %644 = vmatprep.subr.bf16.mxu0 0
    %645 = vmatpush1.bf16.msra.mxu0 %v487
    %646 = vmatprep.subr.bf16.mxu0 0
    %647 = vmatpush1.bf16.msra.mxu0 %v488
    %648 = vmatprep.subr.bf16.mxu0 0
    %649 = vmatpush1.bf16.msra.mxu0 %v489
    %650 = vmatprep.subr.bf16.mxu0 0
    %651 = vmatpush1.bf16.msra.mxu0 %v490
    %652 = vmatprep.subr.bf16.mxu0 0
    %653 = vmatpush1.bf16.msra.mxu0 %v491
    %654 = vmatprep.subr.bf16.mxu0 0
    %655 = vmatpush1.bf16.msra.mxu0 %v492
    %656 = vmatprep.subr.bf16.mxu0 0
    %657 = vmatpush1.bf16.msra.mxu0 %v493
    %658 = vmatprep.subr.bf16.mxu0 0
    %659 = vmatpush1.bf16.msra.mxu0 %v494
    %660 = vmatprep.subr.bf16.mxu0 0
    %661 = vmatpush1.bf16.msra.mxu0 %v495
    %662 = vmatprep.subr.bf16.mxu0 0
    %663 = vmatpush1.bf16.msra.mxu0 %v496
    %664 = vmatprep.subr.bf16.mxu0 0
    %665 = vmatpush1.bf16.msra.mxu0 %v497
    %666 = vmatprep.mubr.bf16.mxu0 %v200
    %667 = vmatmul.mubr.bf16.gmra.mrb[0].mxu0 %v198
    %v668 = vpop.f32.mrb[0].mxu0
    %v669 = vadd.f32 %v629, %v668
    %v670 = vpop.f32.mrb[0].mxu0
    %v671 = vpop.f32.mrb[0].mxu0
    %v672 = vpop.f32.mrb[0].mxu0
    %673 = vdwg.mxu0
    %674 = vmatprep.subr.bf16.mxu0 0
    %675 = vmatpush1.bf16.msra.mxu0 %v498
    %676 = vmatprep.subr.bf16.mxu0 0
    %677 = vmatpush1.bf16.msra.mxu0 %v499
    %678 = vmatprep.subr.bf16.mxu0 0
    %679 = vmatpush1.bf16.msra.mxu0 %v500
    %680 = vmatprep.subr.bf16.mxu0 0
    %681 = vmatpush1.bf16.msra.mxu0 %v501
    %682 = vmatprep.subr.bf16.mxu0 0
    %683 = vmatpush1.bf16.msra.mxu0 %v502
    %684 = vmatprep.subr.bf16.mxu0 0
    %685 = vmatpush1.bf16.msra.mxu0 %v503
    %686 = vmatprep.subr.bf16.mxu0 0
    %687 = vmatpush1.bf16.msra.mxu0 %v504
    %688 = vmatprep.subr.bf16.mxu0 0
    %689 = vmatpush1.bf16.msra.mxu0 %v505
    %690 = vmatprep.subr.bf16.mxu0 0
    %691 = vmatpush1.bf16.msra.mxu0 %v506
    %692 = vmatprep.subr.bf16.mxu0 0
    %693 = vmatpush1.bf16.msra.mxu0 %v507
    %694 = vmatprep.subr.bf16.mxu0 0
    %695 = vmatpush1.bf16.msra.mxu0 %v508
    %696 = vmatprep.subr.bf16.mxu0 0
    %697 = vmatpush1.bf16.msra.mxu0 %v509
    %698 = vmatprep.subr.bf16.mxu0 0
    %699 = vmatpush1.bf16.msra.mxu0 %v510
    %700 = vmatprep.subr.bf16.mxu0 0
    %701 = vmatpush1.bf16.msra.mxu0 %v511
    %702 = vmatprep.subr.bf16.mxu0 0
    %703 = vmatpush1.bf16.msra.mxu0 %v512
    %704 = vmatprep.subr.bf16.mxu0 0
    %705 = vmatpush1.bf16.msra.mxu0 %v513
    %706 = vmatprep.mubr.bf16.mxu0 %v197
    %707 = vmatmul.mubr.bf16.gmra.mrb[0].mxu0 %v183
    %v708 = vpop.f32.mrb[0].mxu0
    %v709 = vadd.f32 %v669, %v708
    %v710 = vpop.f32.mrb[0].mxu0
    %v711 = vpop.f32.mrb[0].mxu0
    %v712 = vpop.f32.mrb[0].mxu0
    %713 = vdwg.mxu0
    %714 = vmatprep.subr.bf16.mxu0 0
    %715 = vmatpush1.bf16.msra.mxu0 %v514
    %716 = vmatprep.subr.bf16.mxu0 0
    %717 = vmatpush1.bf16.msra.mxu0 %v515
    %718 = vmatprep.subr.bf16.mxu0 0
    %719 = vmatpush1.bf16.msra.mxu0 %v516
    %720 = vmatprep.subr.bf16.mxu0 0
    %721 = vmatpush1.bf16.msra.mxu0 %v517
    %722 = vmatprep.subr.bf16.mxu0 0
    %723 = vmatpush1.bf16.msra.mxu0 %v518
    %724 = vmatprep.subr.bf16.mxu0 0
    %725 = vmatpush1.bf16.msra.mxu0 %v519
    %726 = vmatprep.subr.bf16.mxu0 0
    %727 = vmatpush1.bf16.msra.mxu0 %v520
    %728 = vmatprep.subr.bf16.mxu0 0
    %729 = vmatpush1.bf16.msra.mxu0 %v521
    %730 = vmatprep.subr.bf16.mxu0 0
    %731 = vmatpush1.bf16.msra.mxu0 %v522
    %732 = vmatprep.subr.bf16.mxu0 0
    %733 = vmatpush1.bf16.msra.mxu0 %v523
    %734 = vmatprep.subr.bf16.mxu0 0
    %735 = vmatpush1.bf16.msra.mxu0 %v524
    %736 = vmatprep.subr.bf16.mxu0 0
    %737 = vmatpush1.bf16.msra.mxu0 %v525
    %738 = vmatprep.subr.bf16.mxu0 0
    %739 = vmatpush1.bf16.msra.mxu0 %v526
    %740 = vmatprep.subr.bf16.mxu0 0
    %741 = vmatpush1.bf16.msra.mxu0 %v527
    %742 = vmatprep.subr.bf16.mxu0 0
    %743 = vmatpush1.bf16.msra.mxu0 %v528
    %744 = vmatprep.subr.bf16.mxu0 0
    %745 = vmatpush1.bf16.msra.mxu0 %v529
    %746 = vmatprep.mubr.bf16.mxu0 %v201
    %747 = vmatmul.mubr.bf16.gmra.mrb[0].mxu0 %v199
    %v748 = vpop.f32.mrb[0].mxu0
    %v749 = vadd.f32 %v709, %v748
    %v750 = vpop.f32.mrb[0].mxu0
    %v751 = vpop.f32.mrb[0].mxu0
    %v752 = vpop.f32.mrb[0].mxu0
    %753 = vdwg.mxu0
    %vm754 = vcmask 254976
    %755 = vst.msk [vmem:[#allocation2] sm:$0x3] %vm754, %v749
    // Predicated region
    $region14: #{tpu_custom_call.1} parent=1 // pred_check
      _
    $region15: #{tpu_custom_call.1} parent=1 // pred_check_branch
      %757 = sbr.rel (0) target = $region17
    $region16: #{tpu_custom_call.1} parent=1 // pred_region
      %s759 = ssub.s32 32, 32
      %760 = vsyncadd [#allocation3], %s759
      %s762 = sshll.u32 [#allocation2], 4
      %s763 = int_to_ptr.vmem [resolvable:$true] %s762
      %765 = dma.vmem_to_hbm [thread:$0]  %s763, 32, %s3, [#allocation3]
    $region17: #{tpu_custom_call.1} parent=1 // pred_fallthru
      _
    // Predicated region
    $region18: #{tpu_custom_call.1} parent=1 // pred_check
      _
    $region19: #{tpu_custom_call.1} parent=1 // pred_check_branch
      %767 = sbr.rel (0) target = $region21
    $region20: #{tpu_custom_call.1} parent=1 // pred_region
      %768 = dma.done [#allocation3], 32
    $region21: #{tpu_custom_call.1} parent=1 // pred_fallthru
      _
    %769 = vsyncpa [#allocation3], 1

</llo_original>
